<compile_context>
chip_gen: v7x
topology: tpu7x:2x2x1
jax: 0.10.0
libtpu: 0.0.40
codegen_flags: <defaults>
</compile_context>

<pallas_src>
import functools
import math

import jax
import jax.numpy as jnp
from jax.experimental import pallas as pl
from jax.experimental.pallas import tpu as pltpu


# ----------------------------- Pallas kernel -------------------------------
def _make_textcnn_kernel(kernel_sizes, n_filters):
    """Build the fused conv+relu+maxpool+linear+relu kernel (static shapes)."""
    n_k = len(kernel_sizes)

    def kernel(x_ref, *refs):
        conv_w_refs = refs[0:n_k]            # each (n_filters, K)
        conv_b_refs = refs[n_k:2 * n_k]      # each (n_filters, 1)
        wlin_ref = refs[2 * n_k]             # (C, input_size)  -- pre-transposed
        blin_ref = refs[2 * n_k + 1]         # (1, input_size)
        out_ref = refs[2 * n_k + 2]          # (B, input_size)

        x = x_ref[...]                       # (B, S) f32, fully VMEM resident
        B, S = x.shape

        pooled = []
        for i, K in enumerate(kernel_sizes):
            L = S - K + 1
            w = conv_w_refs[i][...]          # (nf, K)
            b = conv_b_refs[i][...]          # (nf, 1)

            # Conv2d(1, nf, (K,1)) on (B,1,S,1) == 1-D valid conv along time.
            # Small K -> static unrolled shift-multiply-accumulate on the VPU.
            acc = jnp.zeros((B, n_filters, L), jnp.float32)
            for k in range(K):
                xk = x[:, k:k + L]           # (B, L)   shifted input window
                wk = w[:, k:k + 1]           # (nf, 1)  per-filter tap k
                acc = acc + wk[None, :, :] * xk[:, None, :]   # (B, nf, L)
            acc = acc + b[None, :, :]        # conv bias

            # ReLU then global max-pool over time. relu(max(z)) == max(relu(z))
            # since ReLU is monotone, so apply ReLU after the (cheaper) reduce.
            pooled.append(jnp.maximum(jnp.max(acc, axis=-1), 0.0))   # (B, nf)

        cat = jnp.concatenate(pooled, axis=-1)        # (B, n_k * nf)
        # Dropout: eval-mode identity.

        # Final Linear + ReLU, fused in the same kernel (MXU, f32 precision).
        y = jnp.dot(cat, wlin_ref[...],
                    preferred_element_type=jnp.float32,
                    precision=jax.lax.Precision.HIGHEST) + blin_ref[...]
        out_ref[...] = jnp.maximum(y, 0.0)

    return kernel


def textcnn_forward(x, params, *, kernel_sizes, n_filters, input_size):
    """x: (B, S) float32. Returns relu(Linear(concat(maxpool(relu(conv_K(x))))))."""
    B, S = x.shape

    conv_ws = [params[f"conv_w_{K}"] for K in kernel_sizes]                  # (nf, K)
    conv_bs = [params[f"conv_b_{K}"].reshape(n_filters, 1)                   # (nf, 1)
               for K in kernel_sizes]
    wlinT = params["w_lin"].T                                                # (C, input_size)
    blin = params["b_lin"].reshape(1, input_size)                            # (1, input_size)

    kernel = _make_textcnn_kernel(kernel_sizes, n_filters)
    n_in = 1 + 2 * len(kernel_sizes) + 2
    vmem = pl.BlockSpec(memory_space=pltpu.MemorySpace.VMEM)

    return pl.pallas_call(
        kernel,
        out_shape=jax.ShapeDtypeStruct((B, input_size), jnp.float32),
        in_specs=[vmem] * n_in,
        out_specs=vmem,
    )(x, *conv_ws, *conv_bs, wlinT, blin)


# ------------------------- Pure-JAX reference (check) ------------------------
def textcnn_ref(x, params, kernel_sizes, n_filters, input_size):
    B, S = x.shape
    pooled = []
    for K in kernel_sizes:
        w = params[f"conv_w_{K}"]                       # (nf, K)
        b = params[f"conv_b_{K}"]                       # (nf,)
        out = jax.lax.conv_general_dilated(
            x[:, None, :, None],                        # (B, 1, S, 1)
            w.reshape(n_filters, 1, K, 1),              # (O, I, K, 1)
            window_strides=(1, 1), padding="VALID",
            dimension_numbers=("NCHW", "OIHW", "NCHW"),
            precision=jax.lax.Precision.HIGHEST)        # (B, nf, L, 1)
        conv = out[:, :, :, 0] + b[None, :, None]
        conv = jax.nn.relu(conv)
        pooled.append(jnp.max(conv, axis=-1))           # (B, nf)
    cat = jnp.concatenate(pooled, axis=-1)              # (B, C)  (dropout = identity)
    y = jnp.dot(cat, params["w_lin"].T,
                precision=jax.lax.Precision.HIGHEST) + params["b_lin"]
    return jax.nn.relu(y)


# ---------------------------------- Main -------------------------------------
if __name__ == "__main__":
    # Small shapes consistent with the module's forward.
    B = 2                       # batch
    S = 16                      # sequence length fed to the convs
    n_filters = 4               # n_filters
    kernel_sizes = (3, 4, 5)    # kernel_size list
    input_size = 32             # Linear output dim (== input_size ctor arg)
    C = len(kernel_sizes) * n_filters

    key = jax.random.PRNGKey(0)
    keys = jax.random.split(key, 2 * len(kernel_sizes) + 3)

    params = {}
    idx = 0
    for K in kernel_sizes:
        bound = 1.0 / math.sqrt(K)          # PyTorch Conv2d default init bound (fan_in = 1*K*1)
        params[f"conv_w_{K}"] = jax.random.uniform(
            keys[idx], (n_filters, K), jnp.float32, minval=-bound, maxval=bound); idx += 1
        params[f"conv_b_{K}"] = jax.random.uniform(
            keys[idx], (n_filters,), jnp.float32, minval=-bound, maxval=bound); idx += 1
    bound = 1.0 / math.sqrt(C)              # PyTorch Linear default init bound
    params["w_lin"] = jax.random.uniform(
        keys[idx], (input_size, C), jnp.float32, minval=-bound, maxval=bound); idx += 1
    params["b_lin"] = jax.random.uniform(
        keys[idx], (input_size,), jnp.float32, minval=-bound, maxval=bound); idx += 1

    x = jax.random.normal(keys[idx], (B, S), jnp.float32)

    fwd = jax.jit(functools.partial(
        textcnn_forward,
        kernel_sizes=kernel_sizes, n_filters=n_filters, input_size=input_size))

    out = fwd(x, params)
    jax.block_until_ready(out)

    ref = textcnn_ref(x, params, kernel_sizes, n_filters, input_size)

    assert out.shape == (B, input_size), out.shape
    assert jnp.allclose(out, ref, atol=1e-4, rtol=1e-4), \
        float(jnp.max(jnp.abs(out - ref)))

    print("KERNEL_OK")
</pallas_src>

<mosaic_0001>
module attributes {stable_mosaic.version = 11 : i64} {
  func.func @kernel(%arg0: memref<2x16xf32, #tpu.memory_space<vmem>>, %arg1: memref<4x3xf32, #tpu.memory_space<vmem>>, %arg2: memref<4x4xf32, #tpu.memory_space<vmem>>, %arg3: memref<4x5xf32, #tpu.memory_space<vmem>>, %arg4: memref<4x1xf32, #tpu.memory_space<vmem>>, %arg5: memref<4x1xf32, #tpu.memory_space<vmem>>, %arg6: memref<4x1xf32, #tpu.memory_space<vmem>>, %arg7: memref<12x32xf32, #tpu.memory_space<vmem>>, %arg8: memref<1x32xf32, #tpu.memory_space<vmem>>, %arg9: memref<2x32xf32, #tpu.memory_space<vmem>>) attributes {dimension_semantics = [], scalar_prefetch = 0 : i64, scratch_operands = 0 : i64, tpu.core_type = #tpu.core_type<tc>} {
    %c0 = arith.constant 0 : index
    %c0_0 = arith.constant 0 : index
    %0 = vector.load %arg0[%c0, %c0_0] : memref<2x16xf32, #tpu.memory_space<vmem>>, vector<2x16xf32>
    %c0_1 = arith.constant 0 : index
    %c0_2 = arith.constant 0 : index
    %1 = vector.load %arg1[%c0_1, %c0_2] : memref<4x3xf32, #tpu.memory_space<vmem>>, vector<4x3xf32>
    %c0_3 = arith.constant 0 : index
    %c0_4 = arith.constant 0 : index
    %2 = vector.load %arg4[%c0_3, %c0_4] : memref<4x1xf32, #tpu.memory_space<vmem>>, vector<4x1xf32>
    %cst = arith.constant 0.000000e+00 : f32
    %3 = vector.broadcast %cst : f32 to vector<2x4x14xf32>
    %4 = vector.extract_strided_slice %0 {offsets = [0, 0], sizes = [2, 14], strides = [1, 1]} : vector<2x16xf32> to vector<2x14xf32>
    %5 = vector.extract_strided_slice %1 {offsets = [0, 0], sizes = [4, 1], strides = [1, 1]} : vector<4x3xf32> to vector<4x1xf32>
    %6 = vector.shape_cast %5 : vector<4x1xf32> to vector<1x4x1xf32>
    %7 = vector.shape_cast %4 : vector<2x14xf32> to vector<2x1x14xf32>
    %8 = vector.broadcast %6 : vector<1x4x1xf32> to vector<2x4x14xf32>
    %9 = vector.broadcast %7 : vector<2x1x14xf32> to vector<2x4x14xf32>
    %10 = arith.mulf %8, %9 : vector<2x4x14xf32>
    %11 = arith.addf %3, %10 : vector<2x4x14xf32>
    %12 = vector.extract_strided_slice %0 {offsets = [0, 1], sizes = [2, 14], strides = [1, 1]} : vector<2x16xf32> to vector<2x14xf32>
    %13 = vector.extract_strided_slice %1 {offsets = [0, 1], sizes = [4, 1], strides = [1, 1]} : vector<4x3xf32> to vector<4x1xf32>
    %14 = vector.shape_cast %13 : vector<4x1xf32> to vector<1x4x1xf32>
    %15 = vector.shape_cast %12 : vector<2x14xf32> to vector<2x1x14xf32>
    %16 = vector.broadcast %14 : vector<1x4x1xf32> to vector<2x4x14xf32>
    %17 = vector.broadcast %15 : vector<2x1x14xf32> to vector<2x4x14xf32>
    %18 = arith.mulf %16, %17 : vector<2x4x14xf32>
    %19 = arith.addf %11, %18 : vector<2x4x14xf32>
    %20 = vector.extract_strided_slice %0 {offsets = [0, 2], sizes = [2, 14], strides = [1, 1]} : vector<2x16xf32> to vector<2x14xf32>
    %21 = vector.extract_strided_slice %1 {offsets = [0, 2], sizes = [4, 1], strides = [1, 1]} : vector<4x3xf32> to vector<4x1xf32>
    %22 = vector.shape_cast %21 : vector<4x1xf32> to vector<1x4x1xf32>
    %23 = vector.shape_cast %20 : vector<2x14xf32> to vector<2x1x14xf32>
    %24 = vector.broadcast %22 : vector<1x4x1xf32> to vector<2x4x14xf32>
    %25 = vector.broadcast %23 : vector<2x1x14xf32> to vector<2x4x14xf32>
    %26 = arith.mulf %24, %25 : vector<2x4x14xf32>
    %27 = arith.addf %19, %26 : vector<2x4x14xf32>
    %28 = vector.shape_cast %2 : vector<4x1xf32> to vector<1x4x1xf32>
    %29 = vector.broadcast %28 : vector<1x4x1xf32> to vector<2x4x14xf32>
    %30 = arith.addf %27, %29 : vector<2x4x14xf32>
    %cst_5 = arith.constant dense<0xFF800000> : vector<2x4xf32>
    %31 = vector.multi_reduction <maximumf>, %30, %cst_5 [2] : vector<2x4x14xf32> to vector<2x4xf32>
    %cst_6 = arith.constant 0.000000e+00 : f32
    %32 = vector.broadcast %cst_6 : f32 to vector<2x4xf32>
    %33 = arith.maximumf %31, %32 : vector<2x4xf32>
    %c0_7 = arith.constant 0 : index
    %c0_8 = arith.constant 0 : index
    %34 = vector.load %arg2[%c0_7, %c0_8] : memref<4x4xf32, #tpu.memory_space<vmem>>, vector<4x4xf32>
    %c0_9 = arith.constant 0 : index
    %c0_10 = arith.constant 0 : index
    %35 = vector.load %arg5[%c0_9, %c0_10] : memref<4x1xf32, #tpu.memory_space<vmem>>, vector<4x1xf32>
    %cst_11 = arith.constant 0.000000e+00 : f32
    %36 = vector.broadcast %cst_11 : f32 to vector<2x4x13xf32>
    %37 = vector.extract_strided_slice %0 {offsets = [0, 0], sizes = [2, 13], strides = [1, 1]} : vector<2x16xf32> to vector<2x13xf32>
    %38 = vector.extract_strided_slice %34 {offsets = [0, 0], sizes = [4, 1], strides = [1, 1]} : vector<4x4xf32> to vector<4x1xf32>
    %39 = vector.shape_cast %38 : vector<4x1xf32> to vector<1x4x1xf32>
    %40 = vector.shape_cast %37 : vector<2x13xf32> to vector<2x1x13xf32>
    %41 = vector.broadcast %39 : vector<1x4x1xf32> to vector<2x4x13xf32>
    %42 = vector.broadcast %40 : vector<2x1x13xf32> to vector<2x4x13xf32>
    %43 = arith.mulf %41, %42 : vector<2x4x13xf32>
    %44 = arith.addf %36, %43 : vector<2x4x13xf32>
    %45 = vector.extract_strided_slice %0 {offsets = [0, 1], sizes = [2, 13], strides = [1, 1]} : vector<2x16xf32> to vector<2x13xf32>
    %46 = vector.extract_strided_slice %34 {offsets = [0, 1], sizes = [4, 1], strides = [1, 1]} : vector<4x4xf32> to vector<4x1xf32>
    %47 = vector.shape_cast %46 : vector<4x1xf32> to vector<1x4x1xf32>
    %48 = vector.shape_cast %45 : vector<2x13xf32> to vector<2x1x13xf32>
    %49 = vector.broadcast %47 : vector<1x4x1xf32> to vector<2x4x13xf32>
    %50 = vector.broadcast %48 : vector<2x1x13xf32> to vector<2x4x13xf32>
    %51 = arith.mulf %49, %50 : vector<2x4x13xf32>
    %52 = arith.addf %44, %51 : vector<2x4x13xf32>
    %53 = vector.extract_strided_slice %0 {offsets = [0, 2], sizes = [2, 13], strides = [1, 1]} : vector<2x16xf32> to vector<2x13xf32>
    %54 = vector.extract_strided_slice %34 {offsets = [0, 2], sizes = [4, 1], strides = [1, 1]} : vector<4x4xf32> to vector<4x1xf32>
    %55 = vector.shape_cast %54 : vector<4x1xf32> to vector<1x4x1xf32>
    %56 = vector.shape_cast %53 : vector<2x13xf32> to vector<2x1x13xf32>
    %57 = vector.broadcast %55 : vector<1x4x1xf32> to vector<2x4x13xf32>
    %58 = vector.broadcast %56 : vector<2x1x13xf32> to vector<2x4x13xf32>
    %59 = arith.mulf %57, %58 : vector<2x4x13xf32>
    %60 = arith.addf %52, %59 : vector<2x4x13xf32>
    %61 = vector.extract_strided_slice %0 {offsets = [0, 3], sizes = [2, 13], strides = [1, 1]} : vector<2x16xf32> to vector<2x13xf32>
    %62 = vector.extract_strided_slice %34 {offsets = [0, 3], sizes = [4, 1], strides = [1, 1]} : vector<4x4xf32> to vector<4x1xf32>
    %63 = vector.shape_cast %62 : vector<4x1xf32> to vector<1x4x1xf32>
    %64 = vector.shape_cast %61 : vector<2x13xf32> to vector<2x1x13xf32>
    %65 = vector.broadcast %63 : vector<1x4x1xf32> to vector<2x4x13xf32>
    %66 = vector.broadcast %64 : vector<2x1x13xf32> to vector<2x4x13xf32>
    %67 = arith.mulf %65, %66 : vector<2x4x13xf32>
    %68 = arith.addf %60, %67 : vector<2x4x13xf32>
    %69 = vector.shape_cast %35 : vector<4x1xf32> to vector<1x4x1xf32>
    %70 = vector.broadcast %69 : vector<1x4x1xf32> to vector<2x4x13xf32>
    %71 = arith.addf %68, %70 : vector<2x4x13xf32>
    %cst_12 = arith.constant dense<0xFF800000> : vector<2x4xf32>
    %72 = vector.multi_reduction <maximumf>, %71, %cst_12 [2] : vector<2x4x13xf32> to vector<2x4xf32>
    %cst_13 = arith.constant 0.000000e+00 : f32
    %73 = vector.broadcast %cst_13 : f32 to vector<2x4xf32>
    %74 = arith.maximumf %72, %73 : vector<2x4xf32>
    %c0_14 = arith.constant 0 : index
    %c0_15 = arith.constant 0 : index
    %75 = vector.load %arg3[%c0_14, %c0_15] : memref<4x5xf32, #tpu.memory_space<vmem>>, vector<4x5xf32>
    %c0_16 = arith.constant 0 : index
    %c0_17 = arith.constant 0 : index
    %76 = vector.load %arg6[%c0_16, %c0_17] : memref<4x1xf32, #tpu.memory_space<vmem>>, vector<4x1xf32>
    %cst_18 = arith.constant 0.000000e+00 : f32
    %77 = vector.broadcast %cst_18 : f32 to vector<2x4x12xf32>
    %78 = vector.extract_strided_slice %0 {offsets = [0, 0], sizes = [2, 12], strides = [1, 1]} : vector<2x16xf32> to vector<2x12xf32>
    %79 = vector.extract_strided_slice %75 {offsets = [0, 0], sizes = [4, 1], strides = [1, 1]} : vector<4x5xf32> to vector<4x1xf32>
    %80 = vector.shape_cast %79 : vector<4x1xf32> to vector<1x4x1xf32>
    %81 = vector.shape_cast %78 : vector<2x12xf32> to vector<2x1x12xf32>
    %82 = vector.broadcast %80 : vector<1x4x1xf32> to vector<2x4x12xf32>
    %83 = vector.broadcast %81 : vector<2x1x12xf32> to vector<2x4x12xf32>
    %84 = arith.mulf %82, %83 : vector<2x4x12xf32>
    %85 = arith.addf %77, %84 : vector<2x4x12xf32>
    %86 = vector.extract_strided_slice %0 {offsets = [0, 1], sizes = [2, 12], strides = [1, 1]} : vector<2x16xf32> to vector<2x12xf32>
    %87 = vector.extract_strided_slice %75 {offsets = [0, 1], sizes = [4, 1], strides = [1, 1]} : vector<4x5xf32> to vector<4x1xf32>
    %88 = vector.shape_cast %87 : vector<4x1xf32> to vector<1x4x1xf32>
    %89 = vector.shape_cast %86 : vector<2x12xf32> to vector<2x1x12xf32>
    %90 = vector.broadcast %88 : vector<1x4x1xf32> to vector<2x4x12xf32>
    %91 = vector.broadcast %89 : vector<2x1x12xf32> to vector<2x4x12xf32>
    %92 = arith.mulf %90, %91 : vector<2x4x12xf32>
    %93 = arith.addf %85, %92 : vector<2x4x12xf32>
    %94 = vector.extract_strided_slice %0 {offsets = [0, 2], sizes = [2, 12], strides = [1, 1]} : vector<2x16xf32> to vector<2x12xf32>
    %95 = vector.extract_strided_slice %75 {offsets = [0, 2], sizes = [4, 1], strides = [1, 1]} : vector<4x5xf32> to vector<4x1xf32>
    %96 = vector.shape_cast %95 : vector<4x1xf32> to vector<1x4x1xf32>
    %97 = vector.shape_cast %94 : vector<2x12xf32> to vector<2x1x12xf32>
    %98 = vector.broadcast %96 : vector<1x4x1xf32> to vector<2x4x12xf32>
    %99 = vector.broadcast %97 : vector<2x1x12xf32> to vector<2x4x12xf32>
    %100 = arith.mulf %98, %99 : vector<2x4x12xf32>
    %101 = arith.addf %93, %100 : vector<2x4x12xf32>
    %102 = vector.extract_strided_slice %0 {offsets = [0, 3], sizes = [2, 12], strides = [1, 1]} : vector<2x16xf32> to vector<2x12xf32>
    %103 = vector.extract_strided_slice %75 {offsets = [0, 3], sizes = [4, 1], strides = [1, 1]} : vector<4x5xf32> to vector<4x1xf32>
    %104 = vector.shape_cast %103 : vector<4x1xf32> to vector<1x4x1xf32>
    %105 = vector.shape_cast %102 : vector<2x12xf32> to vector<2x1x12xf32>
    %106 = vector.broadcast %104 : vector<1x4x1xf32> to vector<2x4x12xf32>
    %107 = vector.broadcast %105 : vector<2x1x12xf32> to vector<2x4x12xf32>
    %108 = arith.mulf %106, %107 : vector<2x4x12xf32>
    %109 = arith.addf %101, %108 : vector<2x4x12xf32>
    %110 = vector.extract_strided_slice %0 {offsets = [0, 4], sizes = [2, 12], strides = [1, 1]} : vector<2x16xf32> to vector<2x12xf32>
    %111 = vector.extract_strided_slice %75 {offsets = [0, 4], sizes = [4, 1], strides = [1, 1]} : vector<4x5xf32> to vector<4x1xf32>
    %112 = vector.shape_cast %111 : vector<4x1xf32> to vector<1x4x1xf32>
    %113 = vector.shape_cast %110 : vector<2x12xf32> to vector<2x1x12xf32>
    %114 = vector.broadcast %112 : vector<1x4x1xf32> to vector<2x4x12xf32>
    %115 = vector.broadcast %113 : vector<2x1x12xf32> to vector<2x4x12xf32>
    %116 = arith.mulf %114, %115 : vector<2x4x12xf32>
    %117 = arith.addf %109, %116 : vector<2x4x12xf32>
    %118 = vector.shape_cast %76 : vector<4x1xf32> to vector<1x4x1xf32>
    %119 = vector.broadcast %118 : vector<1x4x1xf32> to vector<2x4x12xf32>
    %120 = arith.addf %117, %119 : vector<2x4x12xf32>
    %cst_19 = arith.constant dense<0xFF800000> : vector<2x4xf32>
    %121 = vector.multi_reduction <maximumf>, %120, %cst_19 [2] : vector<2x4x12xf32> to vector<2x4xf32>
    %cst_20 = arith.constant 0.000000e+00 : f32
    %122 = vector.broadcast %cst_20 : f32 to vector<2x4xf32>
    %123 = arith.maximumf %121, %122 : vector<2x4xf32>
    %124 = tpu.concatenate %33, %74, %123 in 1 : vector<2x4xf32>, vector<2x4xf32>, vector<2x4xf32> -> vector<2x12xf32>
    %c0_21 = arith.constant 0 : index
    %c0_22 = arith.constant 0 : index
    %125 = vector.load %arg7[%c0_21, %c0_22] : memref<12x32xf32, #tpu.memory_space<vmem>>, vector<12x32xf32>
    %cst_23 = arith.constant dense<0.000000e+00> : vector<2x32xf32>
    %126 = tpu.matmul %124, %125, %cst_23 {dimension_numbers = #tpu.dot_dimension_numbers<[1], [0], [0], [1], [0, 0, 1, 1], [], []>, precision = #tpu.contract_precision<fp32>} : vector<2x12xf32>, vector<12x32xf32>, vector<2x32xf32> -> vector<2x32xf32>
    %c0_24 = arith.constant 0 : index
    %c0_25 = arith.constant 0 : index
    %127 = vector.load %arg8[%c0_24, %c0_25] : memref<1x32xf32, #tpu.memory_space<vmem>>, vector<1x32xf32>
    %128 = vector.broadcast %127 : vector<1x32xf32> to vector<2x32xf32>
    %129 = arith.addf %126, %128 : vector<2x32xf32>
    %cst_26 = arith.constant 0.000000e+00 : f32
    %130 = vector.broadcast %cst_26 : f32 to vector<2x32xf32>
    %131 = arith.maximumf %129, %130 : vector<2x32xf32>
    %c0_27 = arith.constant 0 : index
    %c0_28 = arith.constant 0 : index
    %132 = vector.load %arg9[%c0_27, %c0_28] : memref<2x32xf32, #tpu.memory_space<vmem>>, vector<2x32xf32>
    tpu.vector_store %arg9[%c0_27, %c0_28], %131 {strides = array<i32>} : memref<2x32xf32, #tpu.memory_space<vmem>>, vector<2x32xf32>,
    return
  }
}

</mosaic_0001>

<llo_original>
// kernel: textcnn_forward.1
$region0: #{textcnn_forward.1}
  #allocation0 [shape = 'u32[]', space=smem, size = 0x4, offset = 0x4, fixed_abs, tag = 'smem constant byte address 0x4 - core index']
  #allocation1 [shape = 'u32[144,128]{1,0:T(1,128)}', space=vmem, size = 0x12000, scoped, tag = 'internal scratch']
  %s0 = inlined_call_operand.vmem [shape: f32[2,16], index: 0, kind: input, shape index: {}]
  %s1 = inlined_call_operand.vmem [shape: f32[4,3], index: 1, kind: input, shape index: {}]
  %s2 = inlined_call_operand.vmem [shape: f32[4,4], index: 2, kind: input, shape index: {}]
  %s3 = inlined_call_operand.vmem [shape: f32[4,5], index: 3, kind: input, shape index: {}]
  %s4 = inlined_call_operand.vmem [shape: f32[4,1], index: 4, kind: input, shape index: {}]
  %s5 = inlined_call_operand.vmem [shape: f32[4,1], index: 5, kind: input, shape index: {}]
  %s6 = inlined_call_operand.vmem [shape: f32[4,1], index: 6, kind: input, shape index: {}]
  %s7 = inlined_call_operand.vmem [shape: f32[12,32], index: 7, kind: input, shape index: {}]
  %s8 = inlined_call_operand.vmem [shape: f32[1,32], index: 8, kind: input, shape index: {}]
  %s9 = inlined_call_operand.hbm [shape: f32[2,32], index: 9, kind: output, shape index: {}]
  %s10 = sld [smem:[#allocation0]]
  $region46: #{textcnn_forward.1} parent=0
    _
  %s12 = ssub.s32 1, %s10
  %s13 = scalar_select 0, %s12, %s10
  $region1: #{textcnn_forward.1} parent=0
    #allocation2 [shape = 'u8[1024]{0}', space=vmem, size = 0x400, scoped, tag = 'output window, operand 0, single buffered']
    #allocation3 [shape = 's32[1]{0}', space=sflag, size = 0x4, scoped, tag = 'scoped memory for textcnn_forward.1']
    %14 = vsyncpa [#allocation3], 0
    // Predicated region
    $region2: #{textcnn_forward.1} parent=1 // pred_check
      _
    $region3: #{textcnn_forward.1} parent=1 // pred_check_branch
      %16 = sbr.rel (0) target = $region5
    $region4: #{textcnn_forward.1} parent=1 // pred_region
      _
    $region5: #{textcnn_forward.1} parent=1 // pred_fallthru
      _
    // Predicated region
    $region6: #{textcnn_forward.1} parent=1 // pred_check
      _
    $region7: #{textcnn_forward.1} parent=1 // pred_check_branch
      %18 = sbr.rel (0) target = $region9
    $region8: #{textcnn_forward.1} parent=1 // pred_region
      _
    $region9: #{textcnn_forward.1} parent=1 // pred_fallthru
      _
    // Predicated region
    $region10: #{textcnn_forward.1} parent=1 // pred_check
      _
    $region11: #{textcnn_forward.1} parent=1 // pred_check_branch
      %20 = sbr.rel (0) target = $region13
    $region12: #{textcnn_forward.1} parent=1 // pred_region
      _
    $region13: #{textcnn_forward.1} parent=1 // pred_fallthru
      _
    // Predicated region
    $region14: #{textcnn_forward.1} parent=1 // pred_check
      _
    $region15: #{textcnn_forward.1} parent=1 // pred_check_branch
      %22 = sbr.rel (0) target = $region17
    $region16: #{textcnn_forward.1} parent=1 // pred_region
      _
    $region17: #{textcnn_forward.1} parent=1 // pred_fallthru
      _
    // Predicated region
    $region18: #{textcnn_forward.1} parent=1 // pred_check
      _
    $region19: #{textcnn_forward.1} parent=1 // pred_check_branch
      %24 = sbr.rel (0) target = $region21
    $region20: #{textcnn_forward.1} parent=1 // pred_region
      _
    $region21: #{textcnn_forward.1} parent=1 // pred_fallthru
      _
    // Predicated region
    $region22: #{textcnn_forward.1} parent=1 // pred_check
      _
    $region23: #{textcnn_forward.1} parent=1 // pred_check_branch
      %26 = sbr.rel (0) target = $region25
    $region24: #{textcnn_forward.1} parent=1 // pred_region
      _
    $region25: #{textcnn_forward.1} parent=1 // pred_fallthru
      _
    // Predicated region
    $region26: #{textcnn_forward.1} parent=1 // pred_check
      _
    $region27: #{textcnn_forward.1} parent=1 // pred_check_branch
      %28 = sbr.rel (0) target = $region29
    $region28: #{textcnn_forward.1} parent=1 // pred_region
      _
    $region29: #{textcnn_forward.1} parent=1 // pred_fallthru
      _
    // Predicated region
    $region30: #{textcnn_forward.1} parent=1 // pred_check
      _
    $region31: #{textcnn_forward.1} parent=1 // pred_check_branch
      %30 = sbr.rel (0) target = $region33
    $region32: #{textcnn_forward.1} parent=1 // pred_region
      _
    $region33: #{textcnn_forward.1} parent=1 // pred_fallthru
      _
    // Predicated region
    $region34: #{textcnn_forward.1} parent=1 // pred_check
      _
    $region35: #{textcnn_forward.1} parent=1 // pred_check_branch
      %32 = sbr.rel (0) target = $region37
    $region36: #{textcnn_forward.1} parent=1 // pred_region
      _
    $region37: #{textcnn_forward.1} parent=1 // pred_fallthru
      _
    %v33 = vld [vmem:[%s0] sm:$0x3]
    %v34 = vld [vmem:[%s1] sm:$0xf]
    %v35 = vld [vmem:[%s4] sm:$0xf]
    %v38 = vunpack.c.l.s4 1966171168
    %v39 = vunpack.c.0.s8 %v38
    %v40 = vlaneseq
    %v41 = vshrl.u32 %v40, 7
    %v42 = vsub.s32 %v39, %v41
    %v43 = vrot.slane %v33, %v42
    %v44 = vcombine.high %v43, %v43
    %v46 = vunpack.c.l.s4 1966171168
    %v47 = vunpack.c.0.s8 %v46
    %v48 = vlaneseq
    %v49 = vshrl.u32 %v48, 7
    %v50 = vsub.s32 %v47, %v49
    %v51 = vrot.slane %v43, %v50
    %v53 = vunpack.c.l.s4 1966171168
    %v54 = vunpack.c.0.s8 %v53
    %v55 = vlaneseq
    %v56 = vshrl.u32 %v55, 7
    %v57 = vsub.s32 %v54, %v56
    %v58 = vrot.slane %v44, %v57
    %60 = vset.pattern.permute.xlu0 0
    %61 = vperm.xlu0 %60, %v34
    %v62 = vpop.permute.xlu0 %61
    %v64 = vlaneseq
    %v65 = vshrl.u32 %v64, 7
    %v66 = vsub.s32 0, %v65
    %v67 = vrot.slane %v51, %v66
    %v68 = vlaneseq
    %v69 = vshrl.u32 %v68, 7
    %v70 = vsub.s32 0, %v69
    %v71 = vrot.slane %v58, %v70
    %v74 = vmul.f32 %v62, %v67
    %v75 = vmul.f32 %v62, %v71
    %v76 = vadd.f32 %v74, 0.0
    %v77 = vadd.f32 %v75, 0.0
    %78 = vset.pattern.permute.xlu0 1
    %79 = vperm.xlu0 %78, %v34
    %v80 = vpop.permute.xlu0 %79
    %v82 = vmul.f32 %v80, %v67
    %v83 = vmul.f32 %v80, %v71
    %86 = vrot.lane.b32.xlu0 %v82, 127
    %v87 = vpop.permute.xlu0 %86
    %88 = vrot.lane.b32.xlu0 %v83, 127
    %v89 = vpop.permute.xlu0 %88
    %v92 = vadd.f32 %v76, %v87
    %v93 = vadd.f32 %v77, %v89
    %94 = vset.pattern.permute.xlu0 2
    %95 = vperm.xlu0 %94, %v34
    %v96 = vpop.permute.xlu0 %95
    %v98 = vmul.f32 %v96, %v67
    %v99 = vmul.f32 %v96, %v71
    %102 = vrot.lane.b32.xlu0 %v98, 126
    %v103 = vpop.permute.xlu0 %102
    %104 = vrot.lane.b32.xlu0 %v99, 126
    %v105 = vpop.permute.xlu0 %104
    %v108 = vadd.f32 %v92, %v103
    %v109 = vadd.f32 %v93, %v105
    %111 = vset.pattern.permute.xlu0 0
    %112 = vperm.xlu0 %111, %v35
    %v113 = vpop.permute.xlu0 %112
    %v115 = vadd.f32 %v108, %v113
    %v116 = vadd.f32 %v109, %v113
    %vm117 = vcmask 109568
    %v118 = vsel %vm117, %v115, -inf
    %119 = vmax.xlane.f32.xlu0 %v118
    %v120 = vpop.xlane.xlu0 %119
    %v121 = vsel %vm117, %v116, -inf
    %122 = vmax.xlane.f32.xlu0 %v121
    %v123 = vpop.xlane.xlu0 %122
    %v124 = vmax.f32 %v120, 0.0
    %v125 = vmax.f32 %v123, 0.0
    %v126 = vld [vmem:[%s2] sm:$0xf]
    %v127 = vld [vmem:[%s5] sm:$0xf]
    %129 = vset.pattern.permute.xlu0 0
    %130 = vperm.xlu0 %129, %v126
    %v131 = vpop.permute.xlu0 %130
    %v133 = vmul.f32 %v131, %v67
    %v134 = vmul.f32 %v131, %v71
    %v135 = vadd.f32 %v133, 0.0
    %v136 = vadd.f32 %v134, 0.0
    %137 = vset.pattern.permute.xlu0 1
    %138 = vperm.xlu0 %137, %v126
    %v139 = vpop.permute.xlu0 %138
    %v141 = vmul.f32 %v139, %v67
    %v142 = vmul.f32 %v139, %v71
    %145 = vrot.lane.b32.xlu0 %v141, 127
    %v146 = vpop.permute.xlu0 %145
    %147 = vrot.lane.b32.xlu0 %v142, 127
    %v148 = vpop.permute.xlu0 %147
    %v151 = vadd.f32 %v135, %v146
    %v152 = vadd.f32 %v136, %v148
    %153 = vset.pattern.permute.xlu0 2
    %154 = vperm.xlu0 %153, %v126
    %v155 = vpop.permute.xlu0 %154
    %v157 = vmul.f32 %v155, %v67
    %v158 = vmul.f32 %v155, %v71
    %161 = vrot.lane.b32.xlu0 %v157, 126
    %v162 = vpop.permute.xlu0 %161
    %163 = vrot.lane.b32.xlu0 %v158, 126
    %v164 = vpop.permute.xlu0 %163
    %v167 = vadd.f32 %v151, %v162
    %v168 = vadd.f32 %v152, %v164
    %169 = vset.pattern.permute.xlu0 3
    %170 = vperm.xlu0 %169, %v126
    %v171 = vpop.permute.xlu0 %170
    %v173 = vmul.f32 %v171, %v67
    %v174 = vmul.f32 %v171, %v71
    %177 = vrot.lane.b32.xlu0 %v173, 125
    %v178 = vpop.permute.xlu0 %177
    %179 = vrot.lane.b32.xlu0 %v174, 125
    %v180 = vpop.permute.xlu0 %179
    %v183 = vadd.f32 %v167, %v178
    %v184 = vadd.f32 %v168, %v180
    %186 = vset.pattern.permute.xlu0 0
    %187 = vperm.xlu0 %186, %v127
    %v188 = vpop.permute.xlu0 %187
    %v190 = vadd.f32 %v183, %v188
    %v191 = vadd.f32 %v184, %v188
    %vm192 = vcmask 101376
    %v193 = vsel %vm192, %v190, -inf
    %194 = vmax.xlane.f32.xlu0 %v193
    %v195 = vpop.xlane.xlu0 %194
    %v196 = vsel %vm192, %v191, -inf
    %197 = vmax.xlane.f32.xlu0 %v196
    %v198 = vpop.xlane.xlu0 %197
    %v199 = vmax.f32 %v195, 0.0
    %v200 = vmax.f32 %v198, 0.0
    %v201 = vld [vmem:[%s3] sm:$0xf]
    %v202 = vld [vmem:[%s6] sm:$0xf]
    %204 = vset.pattern.permute.xlu0 0
    %205 = vperm.xlu0 %204, %v201
    %v206 = vpop.permute.xlu0 %205
    %v208 = vmul.f32 %v206, %v67
    %v209 = vmul.f32 %v206, %v71
    %v210 = vadd.f32 %v208, 0.0
    %v211 = vadd.f32 %v209, 0.0
    %212 = vset.pattern.permute.xlu0 1
    %213 = vperm.xlu0 %212, %v201
    %v214 = vpop.permute.xlu0 %213
    %v216 = vmul.f32 %v214, %v67
    %v217 = vmul.f32 %v214, %v71
    %220 = vrot.lane.b32.xlu0 %v216, 127
    %v221 = vpop.permute.xlu0 %220
    %222 = vrot.lane.b32.xlu0 %v217, 127
    %v223 = vpop.permute.xlu0 %222
    %v226 = vadd.f32 %v210, %v221
    %v227 = vadd.f32 %v211, %v223
    %228 = vset.pattern.permute.xlu0 2
    %229 = vperm.xlu0 %228, %v201
    %v230 = vpop.permute.xlu0 %229
    %v232 = vmul.f32 %v230, %v67
    %v233 = vmul.f32 %v230, %v71
    %236 = vrot.lane.b32.xlu0 %v232, 126
    %v237 = vpop.permute.xlu0 %236
    %238 = vrot.lane.b32.xlu0 %v233, 126
    %v239 = vpop.permute.xlu0 %238
    %v242 = vadd.f32 %v226, %v237
    %v243 = vadd.f32 %v227, %v239
    %244 = vset.pattern.permute.xlu0 3
    %245 = vperm.xlu0 %244, %v201
    %v246 = vpop.permute.xlu0 %245
    %v248 = vmul.f32 %v246, %v67
    %v249 = vmul.f32 %v246, %v71
    %252 = vrot.lane.b32.xlu0 %v248, 125
    %v253 = vpop.permute.xlu0 %252
    %254 = vrot.lane.b32.xlu0 %v249, 125
    %v255 = vpop.permute.xlu0 %254
    %v258 = vadd.f32 %v242, %v253
    %v259 = vadd.f32 %v243, %v255
    %260 = vset.pattern.permute.xlu0 4
    %261 = vperm.xlu0 %260, %v201
    %v262 = vpop.permute.xlu0 %261
    %v264 = vmul.f32 %v262, %v67
    %v265 = vmul.f32 %v262, %v71
    %268 = vrot.lane.b32.xlu0 %v264, 124
    %v269 = vpop.permute.xlu0 %268
    %270 = vrot.lane.b32.xlu0 %v265, 124
    %v271 = vpop.permute.xlu0 %270
    %v274 = vadd.f32 %v258, %v269
    %v275 = vadd.f32 %v259, %v271
    %277 = vset.pattern.permute.xlu0 0
    %278 = vperm.xlu0 %277, %v202
    %v279 = vpop.permute.xlu0 %278
    %v281 = vadd.f32 %v274, %v279
    %v282 = vadd.f32 %v275, %v279
    %vm283 = vcmask 93184
    %v284 = vsel %vm283, %v281, -inf
    %285 = vmax.xlane.f32.xlu0 %v284
    %v286 = vpop.xlane.xlu0 %285
    %v287 = vsel %vm283, %v282, -inf
    %288 = vmax.xlane.f32.xlu0 %v287
    %v289 = vpop.xlane.xlu0 %288
    %v290 = vmax.f32 %v286, 0.0
    %v291 = vmax.f32 %v289, 0.0
    %v294 = vlaneseq
    %v295 = vand.u32 %v294, 127
    %v296 = vlaneseq
    %v297 = vshrl.u32 %v296, 7
    %v298 = vsub.s32 %v295, %v297
    %v299 = vrot.slane %v124, %v298
    %v300 = vlaneseq
    %v301 = vshrl.u32 %v300, 7
    %v302 = vsub.s32 %v295, %v301
    %v303 = vrot.slane %v125, %v302
    %vm304 = vcmask 1041409
    %v305 = vsel %vm304, %v303, %v299
    %v309 = vadd.s32 %v295, 4294967292
    %v310 = vlaneseq
    %v311 = vshrl.u32 %v310, 7
    %v312 = vsub.s32 %v309, %v311
    %v313 = vrot.slane %v199, %v312
    %v314 = vlaneseq
    %v315 = vshrl.u32 %v314, 7
    %v316 = vsub.s32 %v309, %v315
    %v317 = vrot.slane %v200, %v316
    %v318 = vsel %vm304, %v317, %v313
    %v322 = vadd.s32 %v295, 4294967288
    %v323 = vlaneseq
    %v324 = vshrl.u32 %v323, 7
    %v325 = vsub.s32 %v322, %v324
    %v326 = vrot.slane %v290, %v325
    %v327 = vlaneseq
    %v328 = vshrl.u32 %v327, 7
    %v329 = vsub.s32 %v322, %v328
    %v330 = vrot.slane %v291, %v329
    %v331 = vsel %vm304, %v330, %v326
    %vm333 = vcmask 31744
    %v334 = vsel %vm333, %v305, %v318
    %vm335 = vcmask 64512
    %v336 = vsel %vm335, %v334, %v331
    %v337 = vld [vmem:[%s7] sm:$0xff]
    %v338 = vld [vmem:[%s7 + $0x8] sm:$0xf]
    %v339 = vld [vmem:[%s8] sm:$0x1]
    %v341 = vlaneseq
    %v342 = vshrl.u32 %v341, 7
    %v343 = vsub.s32 0, %v342
    %v344 = vrot.slane %v339, %v343
    %vm346 = vcmask 97280
    %v348 = vsel %vm346, %v336, 0
    %vm350 = vcmask 1043456
    %v352 = vsel %vm350, %v338, 0
    %354 = vmatprep.subr.mxu0 0.0
    %v355 = vand.u32 %v337, 4294901760
    %356 = vmatpush1.msra.mxu0 %v355
    %357 = vmatprep.subr.mxu0 0.0
    %v358 = vand.u32 %v352, 4294901760
    %359 = vmatpush1.msra.mxu0 %v358
    %360 = vmatprep.subr.mxu0 0.0
    %361 = vmatpush1.msra.mxu0 0.0
    %362 = vmatprep.subr.mxu0 0.0
    %363 = vmatpush1.msra.mxu0 0.0
    %364 = vmatprep.subr.mxu0 0.0
    %365 = vmatpush1.msra.mxu0 0.0
    %366 = vmatprep.subr.mxu0 0.0
    %367 = vmatpush1.msra.mxu0 0.0
    %368 = vmatprep.subr.mxu0 0.0
    %369 = vmatpush1.msra.mxu0 0.0
    %370 = vmatprep.subr.mxu0 0.0
    %371 = vmatpush1.msra.mxu0 0.0
    %372 = vmatprep.subr.mxu0 0.0
    %373 = vmatpush1.msra.mxu0 0.0
    %374 = vmatprep.subr.mxu0 0.0
    %375 = vmatpush1.msra.mxu0 0.0
    %376 = vmatprep.subr.mxu0 0.0
    %377 = vmatpush1.msra.mxu0 0.0
    %378 = vmatprep.subr.mxu0 0.0
    %379 = vmatpush1.msra.mxu0 0.0
    %380 = vmatprep.subr.mxu0 0.0
    %381 = vmatpush1.msra.mxu0 0.0
    %382 = vmatprep.subr.mxu0 0.0
    %383 = vmatpush1.msra.mxu0 0.0
    %384 = vmatprep.subr.mxu0 0.0
    %385 = vmatpush1.msra.mxu0 0.0
    %386 = vmatprep.subr.mxu0 0.0
    %387 = vmatpush1.msra.mxu0 0.0
    %388 = vmatprep.subr.mxu0 0.0
    %389 = vmatpush1.msra.mxu0 0.0
    %390 = vmatprep.subr.mxu0 0.0
    %391 = vmatpush1.msra.mxu0 0.0
    %392 = vmatprep.subr.mxu0 0.0
    %393 = vmatpush1.msra.mxu0 0.0
    %394 = vmatprep.subr.mxu0 0.0
    %395 = vmatpush1.msra.mxu0 0.0
    %396 = vmatprep.subr.mxu0 0.0
    %397 = vmatpush1.msra.mxu0 0.0
    %398 = vmatprep.subr.mxu0 0.0
    %399 = vmatpush1.msra.mxu0 0.0
    %400 = vmatprep.subr.mxu0 0.0
    %401 = vmatpush1.msra.mxu0 0.0
    %402 = vmatprep.subr.mxu0 0.0
    %403 = vmatpush1.msra.mxu0 0.0
    %404 = vmatprep.subr.mxu0 0.0
    %405 = vmatpush1.msra.mxu0 0.0
    %406 = vmatprep.subr.mxu0 0.0
    %407 = vmatpush1.msra.mxu0 0.0
    %408 = vmatprep.subr.mxu0 0.0
    %409 = vmatpush1.msra.mxu0 0.0
    %410 = vmatprep.subr.mxu0 0.0
    %411 = vmatpush1.msra.mxu0 0.0
    %412 = vmatprep.subr.mxu0 0.0
    %413 = vmatpush1.msra.mxu0 0.0
    %414 = vmatprep.subr.mxu0 0.0
    %415 = vmatpush1.msra.mxu0 0.0
    %416 = vmatprep.subr.mxu0 0.0
    %417 = vmatpush1.msra.mxu0 0.0
    %418 = vmatprep.subr.mxu0 0.0
    %419 = vmatpush1.msra.mxu0 0.0
    %420 = vmatprep.mubr.f32.mxu0 0.0
    %v421 = vand.u32 %v348, 4294901760
    %v422 = vsub.f32 %v348, %v421
    %v423 = vand.u32 %v422, 4294901760
    %v424 = vsub.f32 %v422, %v423
    %v425 = vand.u32 %v424, 4294901760
    %426 = vmatmul.mubr.f32.gmra.mrb[0].mxu0 %v425
    %v427 = vpop.f32.mrb[0].mxu0
    %v428 = vadd.f32 %v344, %v427
    %v429 = vpop.f32.mrb[0].mxu0
    %430 = vdwg.mxu0
    %431 = vmatprep.subr.mxu0 0.0
    %v432 = vand.u32 %v337, 4294901760
    %v433 = vsub.f32 %v337, %v432
    %v434 = vand.u32 %v433, 4294901760
    %v435 = vsub.f32 %v433, %v434
    %v436 = vand.u32 %v435, 4294901760
    %437 = vmatpush1.msra.mxu0 %v436
    %438 = vmatprep.subr.mxu0 0.0
    %v439 = vand.u32 %v352, 4294901760
    %v440 = vsub.f32 %v352, %v439
    %v441 = vand.u32 %v440, 4294901760
    %v442 = vsub.f32 %v440, %v441
    %v443 = vand.u32 %v442, 4294901760
    %444 = vmatpush1.msra.mxu0 %v443
    %445 = vmatprep.subr.mxu0 0.0
    %446 = vmatpush1.msra.mxu0 0.0
    %447 = vmatprep.subr.mxu0 0.0
    %448 = vmatpush1.msra.mxu0 0.0
    %449 = vmatprep.subr.mxu0 0.0
    %450 = vmatpush1.msra.mxu0 0.0
    %451 = vmatprep.subr.mxu0 0.0
    %452 = vmatpush1.msra.mxu0 0.0
    %453 = vmatprep.subr.mxu0 0.0
    %454 = vmatpush1.msra.mxu0 0.0
    %455 = vmatprep.subr.mxu0 0.0
    %456 = vmatpush1.msra.mxu0 0.0
    %457 = vmatprep.subr.mxu0 0.0
    %458 = vmatpush1.msra.mxu0 0.0
    %459 = vmatprep.subr.mxu0 0.0
    %460 = vmatpush1.msra.mxu0 0.0
    %461 = vmatprep.subr.mxu0 0.0
    %462 = vmatpush1.msra.mxu0 0.0
    %463 = vmatprep.subr.mxu0 0.0
    %464 = vmatpush1.msra.mxu0 0.0
    %465 = vmatprep.subr.mxu0 0.0
    %466 = vmatpush1.msra.mxu0 0.0
    %467 = vmatprep.subr.mxu0 0.0
    %468 = vmatpush1.msra.mxu0 0.0
    %469 = vmatprep.subr.mxu0 0.0
    %470 = vmatpush1.msra.mxu0 0.0
    %471 = vmatprep.subr.mxu0 0.0
    %472 = vmatpush1.msra.mxu0 0.0
    %473 = vmatprep.subr.mxu0 0.0
    %474 = vmatpush1.msra.mxu0 0.0
    %475 = vmatprep.subr.mxu0 0.0
    %476 = vmatpush1.msra.mxu0 0.0
    %477 = vmatprep.subr.mxu0 0.0
    %478 = vmatpush1.msra.mxu0 0.0
    %479 = vmatprep.subr.mxu0 0.0
    %480 = vmatpush1.msra.mxu0 0.0
    %481 = vmatprep.subr.mxu0 0.0
    %482 = vmatpush1.msra.mxu0 0.0
    %483 = vmatprep.subr.mxu0 0.0
    %484 = vmatpush1.msra.mxu0 0.0
    %485 = vmatprep.subr.mxu0 0.0
    %486 = vmatpush1.msra.mxu0 0.0
    %487 = vmatprep.subr.mxu0 0.0
    %488 = vmatpush1.msra.mxu0 0.0
    %489 = vmatprep.subr.mxu0 0.0
    %490 = vmatpush1.msra.mxu0 0.0
    %491 = vmatprep.subr.mxu0 0.0
    %492 = vmatpush1.msra.mxu0 0.0
    %493 = vmatprep.subr.mxu0 0.0
    %494 = vmatpush1.msra.mxu0 0.0
    %495 = vmatprep.subr.mxu0 0.0
    %496 = vmatpush1.msra.mxu0 0.0
    %497 = vmatprep.subr.mxu0 0.0
    %498 = vmatpush1.msra.mxu0 0.0
    %499 = vmatprep.subr.mxu0 0.0
    %500 = vmatpush1.msra.mxu0 0.0
    %501 = vmatprep.subr.mxu0 0.0
    %502 = vmatpush1.msra.mxu0 0.0
    %503 = vmatprep.subr.mxu0 0.0
    %504 = vmatpush1.msra.mxu0 0.0
    %505 = vmatprep.mubr.f32.mxu0 0.0
    %v506 = vand.u32 %v348, 4294901760
    %507 = vmatmul.mubr.f32.gmra.mrb[0].mxu0 %v506
    %v508 = vpop.f32.mrb[0].mxu0
    %v509 = vadd.f32 %v428, %v508
    %v510 = vpop.f32.mrb[0].mxu0
    %511 = vdwg.mxu0
    %512 = vmatprep.subr.mxu0 0.0
    %v513 = vand.u32 %v337, 4294901760
    %v514 = vsub.f32 %v337, %v513
    %515 = vmatpush1.msra.mxu0 %v514
    %516 = vmatprep.subr.mxu0 0.0
    %v517 = vand.u32 %v352, 4294901760
    %v518 = vsub.f32 %v352, %v517
    %519 = vmatpush1.msra.mxu0 %v518
    %520 = vmatprep.subr.mxu0 0.0
    %521 = vmatpush1.msra.mxu0 0.0
    %522 = vmatprep.subr.mxu0 0.0
    %523 = vmatpush1.msra.mxu0 0.0
    %524 = vmatprep.subr.mxu0 0.0
    %525 = vmatpush1.msra.mxu0 0.0
    %526 = vmatprep.subr.mxu0 0.0
    %527 = vmatpush1.msra.mxu0 0.0
    %528 = vmatprep.subr.mxu0 0.0
    %529 = vmatpush1.msra.mxu0 0.0
    %530 = vmatprep.subr.mxu0 0.0
    %531 = vmatpush1.msra.mxu0 0.0
    %532 = vmatprep.subr.mxu0 0.0
    %533 = vmatpush1.msra.mxu0 0.0
    %534 = vmatprep.subr.mxu0 0.0
    %535 = vmatpush1.msra.mxu0 0.0
    %536 = vmatprep.subr.mxu0 0.0
    %537 = vmatpush1.msra.mxu0 0.0
    %538 = vmatprep.subr.mxu0 0.0
    %539 = vmatpush1.msra.mxu0 0.0
    %540 = vmatprep.subr.mxu0 0.0
    %541 = vmatpush1.msra.mxu0 0.0
    %542 = vmatprep.subr.mxu0 0.0
    %543 = vmatpush1.msra.mxu0 0.0
    %544 = vmatprep.subr.mxu0 0.0
    %545 = vmatpush1.msra.mxu0 0.0
    %546 = vmatprep.subr.mxu0 0.0
    %547 = vmatpush1.msra.mxu0 0.0
    %548 = vmatprep.subr.mxu0 0.0
    %549 = vmatpush1.msra.mxu0 0.0
    %550 = vmatprep.subr.mxu0 0.0
    %551 = vmatpush1.msra.mxu0 0.0
    %552 = vmatprep.subr.mxu0 0.0
    %553 = vmatpush1.msra.mxu0 0.0
    %554 = vmatprep.subr.mxu0 0.0
    %555 = vmatpush1.msra.mxu0 0.0
    %556 = vmatprep.subr.mxu0 0.0
    %557 = vmatpush1.msra.mxu0 0.0
    %558 = vmatprep.subr.mxu0 0.0
    %559 = vmatpush1.msra.mxu0 0.0
    %560 = vmatprep.subr.mxu0 0.0
    %561 = vmatpush1.msra.mxu0 0.0
    %562 = vmatprep.subr.mxu0 0.0
    %563 = vmatpush1.msra.mxu0 0.0
    %564 = vmatprep.subr.mxu0 0.0
    %565 = vmatpush1.msra.mxu0 0.0
    %566 = vmatprep.subr.mxu0 0.0
    %567 = vmatpush1.msra.mxu0 0.0
    %568 = vmatprep.subr.mxu0 0.0
    %569 = vmatpush1.msra.mxu0 0.0
    %570 = vmatprep.subr.mxu0 0.0
    %571 = vmatpush1.msra.mxu0 0.0
    %572 = vmatprep.subr.mxu0 0.0
    %573 = vmatpush1.msra.mxu0 0.0
    %574 = vmatprep.subr.mxu0 0.0
    %575 = vmatpush1.msra.mxu0 0.0
    %576 = vmatprep.subr.mxu0 0.0
    %577 = vmatpush1.msra.mxu0 0.0
    %578 = vmatprep.subr.mxu0 0.0
    %579 = vmatpush1.msra.mxu0 0.0
    %580 = vmatprep.mubr.f32.mxu0 0.0
    %v581 = vand.u32 %v348, 4294901760
    %v582 = vsub.f32 %v348, %v581
    %583 = vmatmul.mubr.f32.gmra.mrb[0].mxu0 %v582
    %v584 = vpop.f32.mrb[0].mxu0
    %v585 = vadd.f32 %v509, %v584
    %v586 = vpop.f32.mrb[0].mxu0
    %587 = vdwg.mxu0
    %588 = vmatprep.subr.mxu0 0.0
    %v589 = vand.u32 %v337, 4294901760
    %590 = vmatpush1.msra.mxu0 %v589
    %591 = vmatprep.subr.mxu0 0.0
    %v592 = vand.u32 %v352, 4294901760
    %593 = vmatpush1.msra.mxu0 %v592
    %594 = vmatprep.subr.mxu0 0.0
    %595 = vmatpush1.msra.mxu0 0.0
    %596 = vmatprep.subr.mxu0 0.0
    %597 = vmatpush1.msra.mxu0 0.0
    %598 = vmatprep.subr.mxu0 0.0
    %599 = vmatpush1.msra.mxu0 0.0
    %600 = vmatprep.subr.mxu0 0.0
    %601 = vmatpush1.msra.mxu0 0.0
    %602 = vmatprep.subr.mxu0 0.0
    %603 = vmatpush1.msra.mxu0 0.0
    %604 = vmatprep.subr.mxu0 0.0
    %605 = vmatpush1.msra.mxu0 0.0
    %606 = vmatprep.subr.mxu0 0.0
    %607 = vmatpush1.msra.mxu0 0.0
    %608 = vmatprep.subr.mxu0 0.0
    %609 = vmatpush1.msra.mxu0 0.0
    %610 = vmatprep.subr.mxu0 0.0
    %611 = vmatpush1.msra.mxu0 0.0
    %612 = vmatprep.subr.mxu0 0.0
    %613 = vmatpush1.msra.mxu0 0.0
    %614 = vmatprep.subr.mxu0 0.0
    %615 = vmatpush1.msra.mxu0 0.0
    %616 = vmatprep.subr.mxu0 0.0
    %617 = vmatpush1.msra.mxu0 0.0
    %618 = vmatprep.subr.mxu0 0.0
    %619 = vmatpush1.msra.mxu0 0.0
    %620 = vmatprep.subr.mxu0 0.0
    %621 = vmatpush1.msra.mxu0 0.0
    %622 = vmatprep.subr.mxu0 0.0
    %623 = vmatpush1.msra.mxu0 0.0
    %624 = vmatprep.subr.mxu0 0.0
    %625 = vmatpush1.msra.mxu0 0.0
    %626 = vmatprep.subr.mxu0 0.0
    %627 = vmatpush1.msra.mxu0 0.0
    %628 = vmatprep.subr.mxu0 0.0
    %629 = vmatpush1.msra.mxu0 0.0
    %630 = vmatprep.subr.mxu0 0.0
    %631 = vmatpush1.msra.mxu0 0.0
    %632 = vmatprep.subr.mxu0 0.0
    %633 = vmatpush1.msra.mxu0 0.0
    %634 = vmatprep.subr.mxu0 0.0
    %635 = vmatpush1.msra.mxu0 0.0
    %636 = vmatprep.subr.mxu0 0.0
    %637 = vmatpush1.msra.mxu0 0.0
    %638 = vmatprep.subr.mxu0 0.0
    %639 = vmatpush1.msra.mxu0 0.0
    %640 = vmatprep.subr.mxu0 0.0
    %641 = vmatpush1.msra.mxu0 0.0
    %642 = vmatprep.subr.mxu0 0.0
    %643 = vmatpush1.msra.mxu0 0.0
    %644 = vmatprep.subr.mxu0 0.0
    %645 = vmatpush1.msra.mxu0 0.0
    %646 = vmatprep.subr.mxu0 0.0
    %647 = vmatpush1.msra.mxu0 0.0
    %648 = vmatprep.subr.mxu0 0.0
    %649 = vmatpush1.msra.mxu0 0.0
    %650 = vmatprep.subr.mxu0 0.0
    %651 = vmatpush1.msra.mxu0 0.0
    %652 = vmatprep.subr.mxu0 0.0
    %653 = vmatpush1.msra.mxu0 0.0
    %654 = vmatprep.mubr.f32.mxu0 0.0
    %v655 = vand.u32 %v348, 4294901760
    %v656 = vsub.f32 %v348, %v655
    %v657 = vand.u32 %v656, 4294901760
    %658 = vmatmul.mubr.f32.gmra.mrb[0].mxu0 %v657
    %v659 = vpop.f32.mrb[0].mxu0
    %v660 = vadd.f32 %v585, %v659
    %v661 = vpop.f32.mrb[0].mxu0
    %662 = vdwg.mxu0
    %663 = vmatprep.subr.mxu0 0.0
    %v664 = vand.u32 %v337, 4294901760
    %v665 = vsub.f32 %v337, %v664
    %v666 = vand.u32 %v665, 4294901760
    %667 = vmatpush1.msra.mxu0 %v666
    %668 = vmatprep.subr.mxu0 0.0
    %v669 = vand.u32 %v352, 4294901760
    %v670 = vsub.f32 %v352, %v669
    %v671 = vand.u32 %v670, 4294901760
    %672 = vmatpush1.msra.mxu0 %v671
    %673 = vmatprep.subr.mxu0 0.0
    %674 = vmatpush1.msra.mxu0 0.0
    %675 = vmatprep.subr.mxu0 0.0
    %676 = vmatpush1.msra.mxu0 0.0
    %677 = vmatprep.subr.mxu0 0.0
    %678 = vmatpush1.msra.mxu0 0.0
    %679 = vmatprep.subr.mxu0 0.0
    %680 = vmatpush1.msra.mxu0 0.0
    %681 = vmatprep.subr.mxu0 0.0
    %682 = vmatpush1.msra.mxu0 0.0
    %683 = vmatprep.subr.mxu0 0.0
    %684 = vmatpush1.msra.mxu0 0.0
    %685 = vmatprep.subr.mxu0 0.0
    %686 = vmatpush1.msra.mxu0 0.0
    %687 = vmatprep.subr.mxu0 0.0
    %688 = vmatpush1.msra.mxu0 0.0
    %689 = vmatprep.subr.mxu0 0.0
    %690 = vmatpush1.msra.mxu0 0.0
    %691 = vmatprep.subr.mxu0 0.0
    %692 = vmatpush1.msra.mxu0 0.0
    %693 = vmatprep.subr.mxu0 0.0
    %694 = vmatpush1.msra.mxu0 0.0
    %695 = vmatprep.subr.mxu0 0.0
    %696 = vmatpush1.msra.mxu0 0.0
    %697 = vmatprep.subr.mxu0 0.0
    %698 = vmatpush1.msra.mxu0 0.0
    %699 = vmatprep.subr.mxu0 0.0
    %700 = vmatpush1.msra.mxu0 0.0
    %701 = vmatprep.subr.mxu0 0.0
    %702 = vmatpush1.msra.mxu0 0.0
    %703 = vmatprep.subr.mxu0 0.0
    %704 = vmatpush1.msra.mxu0 0.0
    %705 = vmatprep.subr.mxu0 0.0
    %706 = vmatpush1.msra.mxu0 0.0
    %707 = vmatprep.subr.mxu0 0.0
    %708 = vmatpush1.msra.mxu0 0.0
    %709 = vmatprep.subr.mxu0 0.0
    %710 = vmatpush1.msra.mxu0 0.0
    %711 = vmatprep.subr.mxu0 0.0
    %712 = vmatpush1.msra.mxu0 0.0
    %713 = vmatprep.subr.mxu0 0.0
    %714 = vmatpush1.msra.mxu0 0.0
    %715 = vmatprep.subr.mxu0 0.0
    %716 = vmatpush1.msra.mxu0 0.0
    %717 = vmatprep.subr.mxu0 0.0
    %718 = vmatpush1.msra.mxu0 0.0
    %719 = vmatprep.subr.mxu0 0.0
    %720 = vmatpush1.msra.mxu0 0.0
    %721 = vmatprep.subr.mxu0 0.0
    %722 = vmatpush1.msra.mxu0 0.0
    %723 = vmatprep.subr.mxu0 0.0
    %724 = vmatpush1.msra.mxu0 0.0
    %725 = vmatprep.subr.mxu0 0.0
    %726 = vmatpush1.msra.mxu0 0.0
    %727 = vmatprep.subr.mxu0 0.0
    %728 = vmatpush1.msra.mxu0 0.0
    %729 = vmatprep.subr.mxu0 0.0
    %730 = vmatpush1.msra.mxu0 0.0
    %731 = vmatprep.subr.mxu0 0.0
    %732 = vmatpush1.msra.mxu0 0.0
    %733 = vmatprep.mubr.f32.mxu0 0.0
    %v734 = vand.u32 %v348, 4294901760
    %735 = vmatmul.mubr.f32.gmra.mrb[0].mxu0 %v734
    %v736 = vpop.f32.mrb[0].mxu0
    %v737 = vadd.f32 %v660, %v736
    %v738 = vpop.f32.mrb[0].mxu0
    %739 = vdwg.mxu0
    %740 = vmatprep.subr.mxu0 0.0
    %v741 = vand.u32 %v337, 4294901760
    %742 = vmatpush1.msra.mxu0 %v741
    %743 = vmatprep.subr.mxu0 0.0
    %v744 = vand.u32 %v352, 4294901760
    %745 = vmatpush1.msra.mxu0 %v744
    %746 = vmatprep.subr.mxu0 0.0
    %747 = vmatpush1.msra.mxu0 0.0
    %748 = vmatprep.subr.mxu0 0.0
    %749 = vmatpush1.msra.mxu0 0.0
    %750 = vmatprep.subr.mxu0 0.0
    %751 = vmatpush1.msra.mxu0 0.0
    %752 = vmatprep.subr.mxu0 0.0
    %753 = vmatpush1.msra.mxu0 0.0
    %754 = vmatprep.subr.mxu0 0.0
    %755 = vmatpush1.msra.mxu0 0.0
    %756 = vmatprep.subr.mxu0 0.0
    %757 = vmatpush1.msra.mxu0 0.0
    %758 = vmatprep.subr.mxu0 0.0
    %759 = vmatpush1.msra.mxu0 0.0
    %760 = vmatprep.subr.mxu0 0.0
    %761 = vmatpush1.msra.mxu0 0.0
    %762 = vmatprep.subr.mxu0 0.0
    %763 = vmatpush1.msra.mxu0 0.0
    %764 = vmatprep.subr.mxu0 0.0
    %765 = vmatpush1.msra.mxu0 0.0
    %766 = vmatprep.subr.mxu0 0.0
    %767 = vmatpush1.msra.mxu0 0.0
    %768 = vmatprep.subr.mxu0 0.0
    %769 = vmatpush1.msra.mxu0 0.0
    %770 = vmatprep.subr.mxu0 0.0
    %771 = vmatpush1.msra.mxu0 0.0
    %772 = vmatprep.subr.mxu0 0.0
    %773 = vmatpush1.msra.mxu0 0.0
    %774 = vmatprep.subr.mxu0 0.0
    %775 = vmatpush1.msra.mxu0 0.0
    %776 = vmatprep.subr.mxu0 0.0
    %777 = vmatpush1.msra.mxu0 0.0
    %778 = vmatprep.subr.mxu0 0.0
    %779 = vmatpush1.msra.mxu0 0.0
    %780 = vmatprep.subr.mxu0 0.0
    %781 = vmatpush1.msra.mxu0 0.0
    %782 = vmatprep.subr.mxu0 0.0
    %783 = vmatpush1.msra.mxu0 0.0
    %784 = vmatprep.subr.mxu0 0.0
    %785 = vmatpush1.msra.mxu0 0.0
    %786 = vmatprep.subr.mxu0 0.0
    %787 = vmatpush1.msra.mxu0 0.0
    %788 = vmatprep.subr.mxu0 0.0
    %789 = vmatpush1.msra.mxu0 0.0
    %790 = vmatprep.subr.mxu0 0.0
    %791 = vmatpush1.msra.mxu0 0.0
    %792 = vmatprep.subr.mxu0 0.0
    %793 = vmatpush1.msra.mxu0 0.0
    %794 = vmatprep.subr.mxu0 0.0
    %795 = vmatpush1.msra.mxu0 0.0
    %796 = vmatprep.subr.mxu0 0.0
    %797 = vmatpush1.msra.mxu0 0.0
    %798 = vmatprep.subr.mxu0 0.0
    %799 = vmatpush1.msra.mxu0 0.0
    %800 = vmatprep.subr.mxu0 0.0
    %801 = vmatpush1.msra.mxu0 0.0
    %802 = vmatprep.subr.mxu0 0.0
    %803 = vmatpush1.msra.mxu0 0.0
    %804 = vmatprep.subr.mxu0 0.0
    %805 = vmatpush1.msra.mxu0 0.0
    %806 = vmatprep.mubr.f32.mxu0 0.0
    %v807 = vand.u32 %v348, 4294901760
    %808 = vmatmul.mubr.f32.gmra.mrb[0].mxu0 %v807
    %v809 = vpop.f32.mrb[0].mxu0
    %v810 = vadd.f32 %v737, %v809
    %v811 = vpop.f32.mrb[0].mxu0
    %812 = vdwg.mxu0
    %v813 = vmax.f32 %v810, 0.0
    %vm814 = vcmask 254976
    %815 = vst.msk [vmem:[#allocation2] sm:$0x3] %vm814, %v813
    // Predicated region
    $region38: #{textcnn_forward.1} parent=1 // pred_check
      _
    $region39: #{textcnn_forward.1} parent=1 // pred_check_branch
      %817 = sbr.rel (0) target = $region41
    $region40: #{textcnn_forward.1} parent=1 // pred_region
      %s819 = ssub.s32 32, 32
      %820 = vsyncadd [#allocation3], %s819
      %s822 = sshll.u32 [#allocation2], 4
      %s823 = int_to_ptr.vmem [resolvable:$true] %s822
      %825 = dma.vmem_to_hbm [thread:$0]  %s823, 32, %s9, [#allocation3]
    $region41: #{textcnn_forward.1} parent=1 // pred_fallthru
      _
    // Predicated region
    $region42: #{textcnn_forward.1} parent=1 // pred_check
      _
    $region43: #{textcnn_forward.1} parent=1 // pred_check_branch
      %827 = sbr.rel (0) target = $region45
    $region44: #{textcnn_forward.1} parent=1 // pred_region
      %828 = dma.done [#allocation3], 32
    $region45: #{textcnn_forward.1} parent=1 // pred_fallthru
      _
    %829 = vsyncpa [#allocation3], 1

</llo_original>
